<compile_context>
chip_gen: v7x
topology: tpu7x:2x2x1
jax: 0.10.0
libtpu: 0.0.40
codegen_flags: <defaults>
</compile_context>

<pallas_src>
import jax
import jax.numpy as jnp
from jax.experimental import pallas as pl
from jax.experimental.pallas import tpu as pltpu


def channel_gate_kernel(x_ref, w1t_ref, b1_ref, w2_ref, b2_ref, o_ref):
    # x_ref block: (1, C, HW)  -- HW on lanes (lane-dense), C on sublanes.
    xb = x_ref[0].astype(jnp.float32)                      # (C, HW)
    hw = xb.shape[-1]

    # ---- Global pooling over the spatial axis (lane reduce -> XLU) ----
    avg_c = jnp.sum(xb, axis=-1, keepdims=True) * (1.0 / hw)   # (C, 1)
    max_c = jnp.max(xb, axis=-1, keepdims=True)                # (C, 1)

    w1t = w1t_ref[...]                                     # (C, hidden)
    b1 = b1_ref[...]                                       # (1, hidden)
    w2 = w2_ref[...]                                       # (C, hidden)
    b2 = b2_ref[...]                                       # (C, 1)

    def mlp(p):                                            # p: (C, 1) -> (C, 1)
        # Linear(C -> hidden) + ReLU: broadcast-mul then sublane reduce.
        h = jnp.sum(w1t * p, axis=0, keepdims=True) + b1   # (1, hidden)
        h = jnp.maximum(h, 0.0)
        # Linear(hidden -> C): broadcast-mul then lane reduce.
        return jnp.sum(w2 * h, axis=1, keepdims=True) + b2  # (C, 1)

    att = mlp(avg_c) + mlp(max_c)                          # (C, 1)
    scale = 1.0 / (1.0 + jnp.exp(-att))                    # sigmoid (EUP)

    # ---- Rescale the resident tile and store lane-dense ----
    o_ref[0] = (xb * scale).astype(o_ref.dtype)


def channel_gate_forward(x, w1, b1, w2, b2):
    """x: (B, C, H, W) f32.
    w1: (hidden, C), b1: (hidden,)   -- torch.nn.Linear(C, hidden)
    w2: (C, hidden), b2: (C,)        -- torch.nn.Linear(hidden, C)
    """
    b, c, h, w = x.shape
    hidden = w1.shape[0]
    hw = h * w

    # Layout glue only: flatten the spatial dims so the lane axis is H*W
    # (contiguous reshape, no data movement), and pre-orient the weights so
    # the kernel needs no transposes.
    x_flat = x.reshape(b, c, hw)
    w1t = jnp.transpose(w1, (1, 0))            # (C, hidden)
    b1_r = b1.reshape(1, hidden)               # (1, hidden)
    w2_r = w2                                  # (C, hidden)
    b2_r = b2.reshape(c, 1)                    # (C, 1)

    out_flat = pl.pallas_call(
        channel_gate_kernel,
        out_shape=jax.ShapeDtypeStruct((b, c, hw), x.dtype),
        grid_spec=pltpu.PrefetchScalarGridSpec(
            num_scalar_prefetch=0,
            grid=(b,),
            in_specs=[
                pl.BlockSpec((1, c, hw), lambda i: (i, 0, 0)),
                pl.BlockSpec((c, hidden), lambda i: (0, 0)),
                pl.BlockSpec((1, hidden), lambda i: (0, 0)),
                pl.BlockSpec((c, hidden), lambda i: (0, 0)),
                pl.BlockSpec((c, 1), lambda i: (0, 0)),
            ],
            out_specs=pl.BlockSpec((1, c, hw), lambda i: (i, 0, 0)),
        ),
        compiler_params=pltpu.CompilerParams(
            dimension_semantics=("parallel",)),
    )(x_flat, w1t, b1_r, w2_r, b2_r)

    return out_flat.reshape(b, c, h, w)


def reference_forward(x, w1, b1, w2, b2):
    """Pure-JAX reference matching the PyTorch channel_gate module."""
    avg = jnp.mean(x, axis=(2, 3))             # (B, C)
    mx = jnp.max(x, axis=(2, 3))               # (B, C)

    def mlp(p):
        h = jnp.maximum(p @ w1.T + b1, 0.0)
        return h @ w2.T + b2

    att = mlp(avg) + mlp(mx)                   # (B, C)
    scale = jax.nn.sigmoid(att)[:, :, None, None]
    return x * scale


if __name__ == "__main__":
    B, C, H, W = 2, 32, 16, 16
    REDUCTION = 16
    HIDDEN = max(C // REDUCTION, 1)            # = 2

    key = jax.random.PRNGKey(0)
    kx, k1, kb1, k2, kb2 = jax.random.split(key, 5)
    x = jax.random.normal(kx, (B, C, H, W), dtype=jnp.float32)
    # torch.nn.Linear weight/bias shapes: (out_features, in_features), (out_features,)
    w1 = 0.2 * jax.random.normal(k1, (HIDDEN, C), dtype=jnp.float32)
    b1 = 0.1 * jax.random.normal(kb1, (HIDDEN,), dtype=jnp.float32)
    w2 = 0.2 * jax.random.normal(k2, (C, HIDDEN), dtype=jnp.float32)
    b2 = 0.1 * jax.random.normal(kb2, (C,), dtype=jnp.float32)

    out = channel_gate_forward(x, w1, b1, w2, b2)
    out = jax.block_until_ready(out)

    ref = jax.block_until_ready(reference_forward(x, w1, b1, w2, b2))
    assert out.shape == (B, C, H, W)
    assert jnp.allclose(out, ref, atol=1e-4, rtol=1e-4), "mismatch vs reference"

    print("KERNEL_OK")
</pallas_src>

<mosaic_0001>
module attributes {stable_mosaic.version = 11 : i64} {
  func.func @channel_gate_kernel(%arg0: i32, %arg1: memref<1x32x256xf32, #tpu.memory_space<vmem>>, %arg2: memref<32x2xf32, #tpu.memory_space<vmem>>, %arg3: memref<1x2xf32, #tpu.memory_space<vmem>>, %arg4: memref<32x2xf32, #tpu.memory_space<vmem>>, %arg5: memref<32x1xf32, #tpu.memory_space<vmem>>, %arg6: memref<1x32x256xf32, #tpu.memory_space<vmem>>) attributes {dimension_semantics = [#tpu.dimension_semantics<parallel>], iteration_bounds = array<i64: 2>, scalar_prefetch = 0 : i64, scratch_operands = 0 : i64, tpu.core_type = #tpu.core_type<tc>, window_params = [{transform_indices = @transform_0, window_bounds = array<i64: 1, 32, 256>}, {pipeline_mode = #tpu.pipeline_mode<synchronous>, transform_indices = @transform_1, window_bounds = array<i64: 32, 2>}, {pipeline_mode = #tpu.pipeline_mode<synchronous>, transform_indices = @transform_2, window_bounds = array<i64: 1, 2>}, {pipeline_mode = #tpu.pipeline_mode<synchronous>, transform_indices = @transform_3, window_bounds = array<i64: 32, 2>}, {pipeline_mode = #tpu.pipeline_mode<synchronous>, transform_indices = @transform_4, window_bounds = array<i64: 32, 1>}, {transform_indices = @transform_5, window_bounds = array<i64: 1, 32, 256>}]} {
    %c0 = arith.constant 0 : index
    %c0_0 = arith.constant 0 : index
    %c0_1 = arith.constant 0 : index
    %0 = vector.load %arg1[%c0, %c0_0, %c0_1] : memref<1x32x256xf32, #tpu.memory_space<vmem>>, vector<1x32x256xf32>
    %1 = vector.shape_cast %0 : vector<1x32x256xf32> to vector<32x256xf32>
    %cst = arith.constant dense<0.000000e+00> : vector<32xf32>
    %2 = vector.multi_reduction <add>, %1, %cst [1] : vector<32x256xf32> to vector<32xf32>
    %3 = vector.shape_cast %2 : vector<32xf32> to vector<32x1xf32>
    %cst_2 = arith.constant 3.906250e-03 : f32
    %4 = vector.broadcast %cst_2 : f32 to vector<32x1xf32>
    %5 = arith.mulf %3, %4 : vector<32x1xf32>
    %cst_3 = arith.constant dense<0xFF800000> : vector<32xf32>
    %6 = vector.multi_reduction <maximumf>, %1, %cst_3 [1] : vector<32x256xf32> to vector<32xf32>
    %7 = vector.shape_cast %6 : vector<32xf32> to vector<32x1xf32>
    %c0_4 = arith.constant 0 : index
    %c0_5 = arith.constant 0 : index
    %8 = vector.load %arg2[%c0_4, %c0_5] : memref<32x2xf32, #tpu.memory_space<vmem>>, vector<32x2xf32>
    %c0_6 = arith.constant 0 : index
    %c0_7 = arith.constant 0 : index
    %9 = vector.load %arg3[%c0_6, %c0_7] : memref<1x2xf32, #tpu.memory_space<vmem>>, vector<1x2xf32>
    %c0_8 = arith.constant 0 : index
    %c0_9 = arith.constant 0 : index
    %10 = vector.load %arg4[%c0_8, %c0_9] : memref<32x2xf32, #tpu.memory_space<vmem>>, vector<32x2xf32>
    %c0_10 = arith.constant 0 : index
    %c0_11 = arith.constant 0 : index
    %11 = vector.load %arg5[%c0_10, %c0_11] : memref<32x1xf32, #tpu.memory_space<vmem>>, vector<32x1xf32>
    %12 = vector.broadcast %5 : vector<32x1xf32> to vector<32x2xf32>
    %13 = arith.mulf %8, %12 : vector<32x2xf32>
    %cst_12 = arith.constant dense<0.000000e+00> : vector<2xf32>
    %14 = vector.multi_reduction <add>, %13, %cst_12 [0] : vector<32x2xf32> to vector<2xf32>
    %15 = vector.shape_cast %14 : vector<2xf32> to vector<1x2xf32>
    %16 = arith.addf %15, %9 : vector<1x2xf32>
    %cst_13 = arith.constant 0.000000e+00 : f32
    %17 = vector.broadcast %cst_13 : f32 to vector<1x2xf32>
    %18 = arith.maximumf %16, %17 : vector<1x2xf32>
    %19 = vector.broadcast %18 : vector<1x2xf32> to vector<32x2xf32>
    %20 = arith.mulf %10, %19 : vector<32x2xf32>
    %cst_14 = arith.constant dense<0.000000e+00> : vector<32xf32>
    %21 = vector.multi_reduction <add>, %20, %cst_14 [1] : vector<32x2xf32> to vector<32xf32>
    %22 = vector.shape_cast %21 : vector<32xf32> to vector<32x1xf32>
    %23 = arith.addf %22, %11 : vector<32x1xf32>
    %24 = vector.broadcast %7 : vector<32x1xf32> to vector<32x2xf32>
    %25 = arith.mulf %8, %24 : vector<32x2xf32>
    %cst_15 = arith.constant dense<0.000000e+00> : vector<2xf32>
    %26 = vector.multi_reduction <add>, %25, %cst_15 [0] : vector<32x2xf32> to vector<2xf32>
    %27 = vector.shape_cast %26 : vector<2xf32> to vector<1x2xf32>
    %28 = arith.addf %27, %9 : vector<1x2xf32>
    %cst_16 = arith.constant 0.000000e+00 : f32
    %29 = vector.broadcast %cst_16 : f32 to vector<1x2xf32>
    %30 = arith.maximumf %28, %29 : vector<1x2xf32>
    %31 = vector.broadcast %30 : vector<1x2xf32> to vector<32x2xf32>
    %32 = arith.mulf %10, %31 : vector<32x2xf32>
    %cst_17 = arith.constant dense<0.000000e+00> : vector<32xf32>
    %33 = vector.multi_reduction <add>, %32, %cst_17 [1] : vector<32x2xf32> to vector<32xf32>
    %34 = vector.shape_cast %33 : vector<32xf32> to vector<32x1xf32>
    %35 = arith.addf %34, %11 : vector<32x1xf32>
    %36 = arith.addf %23, %35 : vector<32x1xf32>
    %cst_18 = arith.constant 0.000000e+00 : f32
    %37 = vector.broadcast %cst_18 : f32 to vector<32x1xf32>
    %38 = arith.subf %37, %36 : vector<32x1xf32>
    %39 = math.exp %38 : vector<32x1xf32>
    %cst_19 = arith.constant 1.000000e+00 : f32
    %40 = vector.broadcast %cst_19 : f32 to vector<32x1xf32>
    %41 = arith.addf %40, %39 : vector<32x1xf32>
    %cst_20 = arith.constant 1.000000e+00 : f32
    %42 = vector.broadcast %cst_20 : f32 to vector<32x1xf32>
    %43 = arith.divf %42, %41 : vector<32x1xf32>
    %44 = vector.broadcast %43 : vector<32x1xf32> to vector<32x256xf32>
    %45 = arith.mulf %1, %44 : vector<32x256xf32>
    %c0_21 = arith.constant 0 : index
    %c0_22 = arith.constant 0 : index
    %c0_23 = arith.constant 0 : index
    %46 = vector.load %arg6[%c0_21, %c0_22, %c0_23] : memref<1x32x256xf32, #tpu.memory_space<vmem>>, vector<1x32x256xf32>
    %47 = vector.shape_cast %46 : vector<1x32x256xf32> to vector<32x256xf32>
    %48 = vector.shape_cast %45 : vector<32x256xf32> to vector<1x32x256xf32>
    tpu.vector_store %arg6[%c0_21, %c0_22, %c0_23], %48 {strides = array<i32>} : memref<1x32x256xf32, #tpu.memory_space<vmem>>, vector<1x32x256xf32>,
    return
  }
  func.func @transform_0(%arg0: i32) -> (i32, i32, i32) {
    %c0_i32 = arith.constant 0 : i32
    %c0_i32_0 = arith.constant 0 : i32
    %c0_i32_1 = arith.constant 0 : i32
    return %arg0, %c0_i32, %c0_i32_0 : i32, i32, i32
  }
  func.func @transform_1(%arg0: i32) -> (i32, i32) {
    %c0_i32 = arith.constant 0 : i32
    %c0_i32_0 = arith.constant 0 : i32
    %c0_i32_1 = arith.constant 0 : i32
    return %c0_i32, %c0_i32_0 : i32, i32
  }
  func.func @transform_2(%arg0: i32) -> (i32, i32) {
    %c0_i32 = arith.constant 0 : i32
    %c0_i32_0 = arith.constant 0 : i32
    %c0_i32_1 = arith.constant 0 : i32
    return %c0_i32, %c0_i32_0 : i32, i32
  }
  func.func @transform_3(%arg0: i32) -> (i32, i32) {
    %c0_i32 = arith.constant 0 : i32
    %c0_i32_0 = arith.constant 0 : i32
    %c0_i32_1 = arith.constant 0 : i32
    return %c0_i32, %c0_i32_0 : i32, i32
  }
  func.func @transform_4(%arg0: i32) -> (i32, i32) {
    %c0_i32 = arith.constant 0 : i32
    %c0_i32_0 = arith.constant 0 : i32
    %c0_i32_1 = arith.constant 0 : i32
    return %c0_i32, %c0_i32_0 : i32, i32
  }
  func.func @transform_5(%arg0: i32) -> (i32, i32, i32) {
    %c0_i32 = arith.constant 0 : i32
    %c0_i32_0 = arith.constant 0 : i32
    %c0_i32_1 = arith.constant 0 : i32
    return %arg0, %c0_i32, %c0_i32_0 : i32, i32, i32
  }
}

</mosaic_0001>

<llo_original>
// kernel: tpu_custom_call.1
$region0: #{tpu_custom_call.1}
  #allocation0 [shape = 'u32[]', space=smem, size = 0x4, offset = 0x4, fixed_abs, tag = 'smem constant byte address 0x4 - core index']
  #allocation1 [shape = 'u32[144,128]{1,0:T(1,128)}', space=vmem, size = 0x12000, scoped, tag = 'internal scratch']
  %s0 = inlined_call_operand.hbm [shape: f32[2,32,256], index: 0, kind: input, shape index: {}]
  %s1 = inlined_call_operand.vmem [shape: f32[32,2], index: 1, kind: input, shape index: {}]
  %s2 = inlined_call_operand.vmem [shape: f32[1,2], index: 2, kind: input, shape index: {}]
  %s3 = inlined_call_operand.vmem [shape: f32[32,2], index: 3, kind: input, shape index: {}]
  %s4 = inlined_call_operand.vmem [shape: f32[32,1], index: 4, kind: input, shape index: {}]
  %s5 = inlined_call_operand.hbm [shape: f32[2,32,256], index: 5, kind: output, shape index: {}]
  %s6 = sld [smem:[#allocation0]]
  $region57: #{tpu_custom_call.1} parent=0
    _
  %s8 = ssub.s32 1, %s6
  %s9 = scalar_select 0, %s8, %s6
  $region1: #{tpu_custom_call.1} parent=0
    #allocation2 [shape = 'u8[65536]{0}', space=vmem, size = 0x10000, scoped, tag = 'input window, operand 0']
    #allocation3 [shape = 's32[2]{0}', space=sflag, size = 0x8, scoped, tag = 'scoped memory for tpu_custom_call.1']
    #allocation4 [shape = 's32[2]{0}', space=sflag, size = 0x8, scoped, tag = 'scoped memory for tpu_custom_call.1']
    #allocation5 [shape = 'u8[65536]{0}', space=vmem, size = 0x10000, scoped, tag = 'output window, operand 0']
    %10 = vsyncpa [#allocation3], 0
    %s11 = scalar_lea.sflag [#allocation3], 1
    %12 = vsyncpa %s11, 0
    %13 = vsyncpa [#allocation4], 0
    %s14 = scalar_lea.sflag [#allocation4], 1
    %15 = vsyncpa %s14, 0
    loop: start=0, step=1, limit=4
    $region2: #{tpu_custom_call.1} parent=1 // loop_pre_header
      _
    $region3: #{tpu_custom_call.1} parent=1 // loop_header
      %s17 = sphi 0, %s21
      %p18 = scmp.ge.s32.totalorder %s17, 4
      %s27 = sphi 0, %s29
      %s30 = sphi 0, %s27
      %s31 = sphi 0, %s30
      %s47 = sphi 0, %s31
      %s51 = sphi 0, %s51
      %s53 = sphi 0, %s51
      %s54 = sphi 0, %s53
      %s68 = sphi 0, %s54
      %s72 = sphi 0, %s72
      %s74 = sphi 0, %s72
      %s75 = sphi 0, %s74
      %s89 = sphi 0, %s75
      %s93 = sphi 0, %s93
      %s95 = sphi 0, %s93
      %s96 = sphi 0, %s95
      %s110 = sphi 0, %s96
      %s114 = sphi 0, %s114
      %s116 = sphi 0, %s114
      %s117 = sphi 0, %s116
      %s131 = sphi 0, %s117
      %s137 = sphi 0, %s139
      %s140 = sphi 0, %s137
      %s141 = sphi 0, %s140
      %s157 = sphi 0, %s141
    $region4: #{tpu_custom_call.1} parent=1 // loop_header_branch
      %20 = sbr.rel (%p18) target = $region8
    $region5: #{tpu_custom_call.1} parent=1 // loop_body
      %s22 = ssub.s32 %s17, 1
      %s23 = ssub.s32 %s17, 2
      %s24 = sadd.s32 %s17, 1
      %s25 = ssub.s32 %s17, %s24
      %p26 = scmp.eq.s32.totalorder %s25, 0
      %s28 = sadd.s32 %s27, 1
      %s29 = scalar_select %p26, %s27, %s28
      %p32 = pneg %p26
      %p33 = scmp.eq.s32.totalorder %s17, 1
      %p34 = por %p32, %p33
      %p35 = scmp.ne.s32.totalorder %s27, %s30
      %p36 = scmp.eq.s32.totalorder %s17, 0
      %p37 = por %p35, %p36
      %p38 = scmp.ne.s32.totalorder %s27, %s30
      %p39 = scmp.eq.s32.totalorder %s22, 1
      %p40 = por %p38, %p39
      %p41 = scmp.ne.s32.totalorder %s30, %s31
      %p42 = scmp.eq.s32.totalorder %s22, 0
      %p43 = por %p41, %p42
      %p44 = scmp.ne.s32.totalorder %s30, %s31
      %p45 = scmp.eq.s32.totalorder %s23, 1
      %p46 = por %p44, %p45
      %p48 = scmp.ne.s32.totalorder %s31, %s47
      %p49 = scmp.eq.s32.totalorder %s23, 0
      %p50 = por %p48, %p49
      %s52 = sadd.s32 %s51, 1
      %p55 = scmp.eq.s32.totalorder %s17, 1
      %p56 = scmp.ne.s32.totalorder %s51, %s53
      %p57 = scmp.eq.s32.totalorder %s17, 0
      %p58 = por %p56, %p57
      %p59 = scmp.ne.s32.totalorder %s51, %s53
      %p60 = scmp.eq.s32.totalorder %s22, 1
      %p61 = por %p59, %p60
      %p62 = scmp.ne.s32.totalorder %s53, %s54
      %p63 = scmp.eq.s32.totalorder %s22, 0
      %p64 = por %p62, %p63
      %p65 = scmp.ne.s32.totalorder %s53, %s54
      %p66 = scmp.eq.s32.totalorder %s23, 1
      %p67 = por %p65, %p66
      %p69 = scmp.ne.s32.totalorder %s54, %s68
      %p70 = scmp.eq.s32.totalorder %s23, 0
      %p71 = por %p69, %p70
      %s73 = sadd.s32 %s72, 1
      %p76 = scmp.eq.s32.totalorder %s17, 1
      %p77 = scmp.ne.s32.totalorder %s72, %s74
      %p78 = scmp.eq.s32.totalorder %s17, 0
      %p79 = por %p77, %p78
      %p80 = scmp.ne.s32.totalorder %s72, %s74
      %p81 = scmp.eq.s32.totalorder %s22, 1
      %p82 = por %p80, %p81
      %p83 = scmp.ne.s32.totalorder %s74, %s75
      %p84 = scmp.eq.s32.totalorder %s22, 0
      %p85 = por %p83, %p84
      %p86 = scmp.ne.s32.totalorder %s74, %s75
      %p87 = scmp.eq.s32.totalorder %s23, 1
      %p88 = por %p86, %p87
      %p90 = scmp.ne.s32.totalorder %s75, %s89
      %p91 = scmp.eq.s32.totalorder %s23, 0
      %p92 = por %p90, %p91
      %s94 = sadd.s32 %s93, 1
      %p97 = scmp.eq.s32.totalorder %s17, 1
      %p98 = scmp.ne.s32.totalorder %s93, %s95
      %p99 = scmp.eq.s32.totalorder %s17, 0
      %p100 = por %p98, %p99
      %p101 = scmp.ne.s32.totalorder %s93, %s95
      %p102 = scmp.eq.s32.totalorder %s22, 1
      %p103 = por %p101, %p102
      %p104 = scmp.ne.s32.totalorder %s95, %s96
      %p105 = scmp.eq.s32.totalorder %s22, 0
      %p106 = por %p104, %p105
      %p107 = scmp.ne.s32.totalorder %s95, %s96
      %p108 = scmp.eq.s32.totalorder %s23, 1
      %p109 = por %p107, %p108
      %p111 = scmp.ne.s32.totalorder %s96, %s110
      %p112 = scmp.eq.s32.totalorder %s23, 0
      %p113 = por %p111, %p112
      %s115 = sadd.s32 %s114, 1
      %p118 = scmp.eq.s32.totalorder %s17, 1
      %p119 = scmp.ne.s32.totalorder %s114, %s116
      %p120 = scmp.eq.s32.totalorder %s17, 0
      %p121 = por %p119, %p120
      %p122 = scmp.ne.s32.totalorder %s114, %s116
      %p123 = scmp.eq.s32.totalorder %s22, 1
      %p124 = por %p122, %p123
      %p125 = scmp.ne.s32.totalorder %s116, %s117
      %p126 = scmp.eq.s32.totalorder %s22, 0
      %p127 = por %p125, %p126
      %p128 = scmp.ne.s32.totalorder %s116, %s117
      %p129 = scmp.eq.s32.totalorder %s23, 1
      %p130 = por %p128, %p129
      %p132 = scmp.ne.s32.totalorder %s117, %s131
      %p133 = scmp.eq.s32.totalorder %s23, 0
      %p134 = por %p132, %p133
      %s135 = ssub.s32 %s17, %s24
      %p136 = scmp.eq.s32.totalorder %s135, 0
      %s138 = sadd.s32 %s137, 1
      %s139 = scalar_select %p136, %s137, %s138
      %p142 = pneg %p136
      %p143 = scmp.eq.s32.totalorder %s17, 1
      %p144 = por %p142, %p143
      %p145 = scmp.ne.s32.totalorder %s137, %s140
      %p146 = scmp.eq.s32.totalorder %s17, 0
      %p147 = por %p145, %p146
      %p148 = scmp.ne.s32.totalorder %s137, %s140
      %p149 = scmp.eq.s32.totalorder %s22, 1
      %p150 = por %p148, %p149
      %p151 = scmp.ne.s32.totalorder %s140, %s141
      %p152 = scmp.eq.s32.totalorder %s22, 0
      %p153 = por %p151, %p152
      %p154 = scmp.ne.s32.totalorder %s140, %s141
      %p155 = scmp.eq.s32.totalorder %s23, 1
      %p156 = por %p154, %p155
      %p158 = scmp.ne.s32.totalorder %s141, %s157
      %p159 = scmp.eq.s32.totalorder %s23, 0
      %p160 = por %p158, %p159
      %p161 = scmp.le.s32.totalorder 1, %s17
      %p162 = scmp.lt.s32.totalorder %s17, 3
      %p163 = pnand %p161, %p162
      %p164 = pneg %p163
      // Predicated region
      $region9: #{tpu_custom_call.1} parent=5 // pred_check
        _
      $region10: #{tpu_custom_call.1} parent=5 // pred_check_branch
        %166 = sbr.rel (%p163) target = $region12
      $region11: #{tpu_custom_call.1} parent=5 // pred_region
        %s167 = ssub.s32 %s17, 1
        // Predicated region
        $region13: #{tpu_custom_call.1} parent=11 // pred_check
          %p168 = pneg %p64
        $region14: #{tpu_custom_call.1} parent=11 // pred_check_branch
          %170 = sbr.rel (%p168) target = $region16
        $region15: #{tpu_custom_call.1} parent=11 // pred_region
          _
        $region16: #{tpu_custom_call.1} parent=11 // pred_fallthru
          _
        // Predicated region
        $region17: #{tpu_custom_call.1} parent=11 // pred_check
          %p171 = pneg %p85
        $region18: #{tpu_custom_call.1} parent=11 // pred_check_branch
          %173 = sbr.rel (%p171) target = $region20
        $region19: #{tpu_custom_call.1} parent=11 // pred_region
          _
        $region20: #{tpu_custom_call.1} parent=11 // pred_fallthru
          _
        // Predicated region
        $region21: #{tpu_custom_call.1} parent=11 // pred_check
          %p174 = pneg %p106
        $region22: #{tpu_custom_call.1} parent=11 // pred_check_branch
          %176 = sbr.rel (%p174) target = $region24
        $region23: #{tpu_custom_call.1} parent=11 // pred_region
          _
        $region24: #{tpu_custom_call.1} parent=11 // pred_fallthru
          _
        // Predicated region
        $region25: #{tpu_custom_call.1} parent=11 // pred_check
          %p177 = pneg %p127
        $region26: #{tpu_custom_call.1} parent=11 // pred_check_branch
          %179 = sbr.rel (%p177) target = $region28
        $region27: #{tpu_custom_call.1} parent=11 // pred_region
          _
        $region28: #{tpu_custom_call.1} parent=11 // pred_fallthru
          _
      $region12: #{tpu_custom_call.1} parent=5 // pred_fallthru
        _
      %p180 = scmp.lt.s32.totalorder %s17, 2
      // Predicated region
      $region29: #{tpu_custom_call.1} parent=5 // pred_check
        %p181 = pneg %p180
      $region30: #{tpu_custom_call.1} parent=5 // pred_check_branch
        %183 = sbr.rel (%p181) target = $region32
      $region31: #{tpu_custom_call.1} parent=5 // pred_region
        // Predicated region
        $region33: #{tpu_custom_call.1} parent=31 // pred_check
          %p184 = pneg %p37
        $region34: #{tpu_custom_call.1} parent=31 // pred_check_branch
          %186 = sbr.rel (%p184) target = $region36
        $region35: #{tpu_custom_call.1} parent=31 // pred_region
          %s187 = sand.u32 %s27, 1
          %s188 = scalar_lea.sflag [#allocation3], %s187
          %s189 = sand.u32 %s27, 1
          %s190 = smul.addr %s189, 64
          %s191 = scalar_lea.vmem [#allocation2], %s190
          %s193 = ssub.s32 1024, 1024
          %194 = vsyncadd %s188, %s193
          %s195 = smul.addr %s17, 8
          %s196 = smul.addr %s195, 128
          %s197 = scalar_lea.hbm %s0, %s196
          %s198 = sshll.u32 %s191, 4
          %s199 = int_to_ptr.vmem [resolvable:$true] %s198
          %204 = dma.hbm_to_vmem [thread:$0]  %s197, 1024, %s199, %s188, 256, 256, 16
        $region36: #{tpu_custom_call.1} parent=31 // pred_fallthru
          _
      $region32: #{tpu_custom_call.1} parent=5 // pred_fallthru
        _
      %p205 = scmp.le.s32.totalorder 1, %s17
      %p206 = scmp.lt.s32.totalorder %s17, 3
      %p207 = pnand %p205, %p206
      %p208 = pneg %p207
      // Predicated region
      $region37: #{tpu_custom_call.1} parent=5 // pred_check
        _
      $region38: #{tpu_custom_call.1} parent=5 // pred_check_branch
        %210 = sbr.rel (%p207) target = $region40
      $region39: #{tpu_custom_call.1} parent=5 // pred_region
        %s211 = ssub.s32 %s17, 1
        %s212 = sand.u32 %s30, 1
        %s213 = scalar_lea.sflag [#allocation3], %s212
        %s214 = sand.u32 %s30, 1
        %s215 = smul.addr %s214, 64
        %s216 = scalar_lea.vmem [#allocation2], %s215
        // Predicated region
        $region41: #{tpu_custom_call.1} parent=39 // pred_check
          %p217 = pneg %p43
        $region42: #{tpu_custom_call.1} parent=39 // pred_check_branch
          %219 = sbr.rel (%p217) target = $region44
        $region43: #{tpu_custom_call.1} parent=39 // pred_region
          %220 = dma.done %s213, 1024
        $region44: #{tpu_custom_call.1} parent=39 // pred_fallthru
          _
        %s221 = sand.u32 %s30, 1
        %s222 = scalar_lea.sflag [#allocation3], %s221
        %s223 = sand.u32 %s30, 1
        %s224 = smul.addr %s223, 64
        %s225 = scalar_lea.vmem [#allocation2], %s224
        %p226 = pneg %p43
        %p227 = pneg %p40
        %p228 = pneg %p64
        %p229 = pneg %p61
        %p230 = pneg %p85
        %p231 = pneg %p82
        %p232 = pneg %p106
        %p233 = pneg %p103
        %p234 = pneg %p127
        %p235 = pneg %p124
        %p236 = pneg %p153
        %p237 = pneg %p150
        %s238 = sand.u32 %s140, 1
        %s239 = scalar_lea.sflag [#allocation4], %s238
        %s240 = sand.u32 %s140, 1
        %s241 = smul.addr %s240, 64
        %s242 = scalar_lea.vmem [#allocation5], %s241
        %v243 = vld [vmem:[%s216] sm:$0xff]
        %v244 = vld [vmem:[%s216 + $0x8] sm:$0xff]
        %v245 = vld [vmem:[%s216 + $0x10] sm:$0xff]
        %v246 = vld [vmem:[%s216 + $0x18] sm:$0xff]
        %v247 = vld [vmem:[%s216 + $0x20] sm:$0xff]
        %v248 = vld [vmem:[%s216 + $0x28] sm:$0xff]
        %v249 = vld [vmem:[%s216 + $0x30] sm:$0xff]
        %v250 = vld [vmem:[%s216 + $0x38] sm:$0xff]
        %v251 = vadd.f32 %v243, %v244
        %252 = vadd.xlane.f32.xlu0 %v251
        %v253 = vpop.xlane.xlu0 %252
        %v254 = vadd.f32 %v245, %v246
        %255 = vadd.xlane.f32.xlu0 %v254
        %v256 = vpop.xlane.xlu0 %255
        %v257 = vadd.f32 %v247, %v248
        %258 = vadd.xlane.f32.xlu0 %v257
        %v259 = vpop.xlane.xlu0 %258
        %v260 = vadd.f32 %v249, %v250
        %261 = vadd.xlane.f32.xlu0 %v260
        %v262 = vpop.xlane.xlu0 %261
        %v263 = vmul.f32 %v253, 0.00390625
        %v264 = vmul.f32 %v256, 0.00390625
        %v265 = vmul.f32 %v259, 0.00390625
        %v266 = vmul.f32 %v262, 0.00390625
        %v267 = vmax.f32 %v243, %v244
        %268 = vmax.xlane.f32.xlu0 %v267
        %v269 = vpop.xlane.xlu0 %268
        %v270 = vmax.f32 %v245, %v246
        %271 = vmax.xlane.f32.xlu0 %v270
        %v272 = vpop.xlane.xlu0 %271
        %v273 = vmax.f32 %v247, %v248
        %274 = vmax.xlane.f32.xlu0 %v273
        %v275 = vpop.xlane.xlu0 %274
        %v276 = vmax.f32 %v249, %v250
        %277 = vmax.xlane.f32.xlu0 %v276
        %v278 = vpop.xlane.xlu0 %277
        %v279 = vld [vmem:[%s1] sm:$0xff]
        %v280 = vld [vmem:[%s1 + $0x8] sm:$0xff]
        %v281 = vld [vmem:[%s1 + $0x10] sm:$0xff]
        %v282 = vld [vmem:[%s1 + $0x18] sm:$0xff]
        %v283 = vld [vmem:[%s2] sm:$0x1]
        %v284 = vld [vmem:[%s3] sm:$0xff]
        %v285 = vld [vmem:[%s3 + $0x8] sm:$0xff]
        %v286 = vld [vmem:[%s3 + $0x10] sm:$0xff]
        %v287 = vld [vmem:[%s3 + $0x18] sm:$0xff]
        %v288 = vld [vmem:[%s4] sm:$0xff]
        %v289 = vld [vmem:[%s4 + $0x8] sm:$0xff]
        %v290 = vld [vmem:[%s4 + $0x10] sm:$0xff]
        %v291 = vld [vmem:[%s4 + $0x18] sm:$0xff]
        %v292 = vmul.f32 %v279, %v263
        %v293 = vmul.f32 %v280, %v264
        %v294 = vmul.f32 %v281, %v265
        %v295 = vmul.f32 %v282, %v266
        %vm296 = vcmask 15360
        %v297 = vsel %vm296, %v292, 0.0
        %v298 = vsel %vm296, %v293, 0.0
        %v299 = vadd.f32 %v297, %v298
        %v300 = vsel %vm296, %v294, 0.0
        %v301 = vadd.f32 %v299, %v300
        %v302 = vsel %vm296, %v295, 0.0
        %v303 = vadd.f32 %v301, %v302
        %v304 = vrot.slane %v303, 4
        %v305 = vadd.f32 %v303, %v304
        %v306 = vrot.slane %v305, 2
        %v307 = vadd.f32 %v305, %v306
        %v308 = vrot.slane %v307, 1
        %v309 = vadd.f32 %v307, %v308
        %v310 = vadd.f32 %v309, %v283
        %v311 = vmax.f32 %v310, 0.0
        %v312 = vlaneseq
        %v313 = vshrl.u32 %v312, 7
        %v314 = vsub.s32 0, %v313
        %v315 = vrot.slane %v311, %v314
        %v316 = vmul.f32 %v284, %v315
        %v317 = vmul.f32 %v285, %v315
        %v318 = vmul.f32 %v286, %v315
        %v319 = vmul.f32 %v287, %v315
        %v320 = vsel %vm296, %v316, 0.0
        %321 = vadd.xlane.f32.xlu0 %v320
        %v322 = vpop.xlane.xlu0 %321
        %v323 = vsel %vm296, %v317, 0.0
        %324 = vadd.xlane.f32.xlu0 %v323
        %v325 = vpop.xlane.xlu0 %324
        %v326 = vsel %vm296, %v318, 0.0
        %327 = vadd.xlane.f32.xlu0 %v326
        %v328 = vpop.xlane.xlu0 %327
        %v329 = vsel %vm296, %v319, 0.0
        %330 = vadd.xlane.f32.xlu0 %v329
        %v331 = vpop.xlane.xlu0 %330
        %v332 = vadd.f32 %v322, %v288
        %v333 = vadd.f32 %v325, %v289
        %v334 = vadd.f32 %v328, %v290
        %v335 = vadd.f32 %v331, %v291
        %v336 = vmul.f32 %v279, %v269
        %v337 = vmul.f32 %v280, %v272
        %v338 = vmul.f32 %v281, %v275
        %v339 = vmul.f32 %v282, %v278
        %v340 = vsel %vm296, %v336, 0.0
        %v341 = vsel %vm296, %v337, 0.0
        %v342 = vadd.f32 %v340, %v341
        %v343 = vsel %vm296, %v338, 0.0
        %v344 = vadd.f32 %v342, %v343
        %v345 = vsel %vm296, %v339, 0.0
        %v346 = vadd.f32 %v344, %v345
        %v347 = vrot.slane %v346, 4
        %v348 = vadd.f32 %v346, %v347
        %v349 = vrot.slane %v348, 2
        %v350 = vadd.f32 %v348, %v349
        %v351 = vrot.slane %v350, 1
        %v352 = vadd.f32 %v350, %v351
        %v353 = vadd.f32 %v352, %v283
        %v354 = vmax.f32 %v353, 0.0
        %v355 = vlaneseq
        %v356 = vshrl.u32 %v355, 7
        %v357 = vsub.s32 0, %v356
        %v358 = vrot.slane %v354, %v357
        %v359 = vmul.f32 %v284, %v358
        %v360 = vmul.f32 %v285, %v358
        %v361 = vmul.f32 %v286, %v358
        %v362 = vmul.f32 %v287, %v358
        %v363 = vsel %vm296, %v359, 0.0
        %364 = vadd.xlane.f32.xlu0 %v363
        %v365 = vpop.xlane.xlu0 %364
        %v366 = vsel %vm296, %v360, 0.0
        %367 = vadd.xlane.f32.xlu0 %v366
        %v368 = vpop.xlane.xlu0 %367
        %v369 = vsel %vm296, %v361, 0.0
        %370 = vadd.xlane.f32.xlu0 %v369
        %v371 = vpop.xlane.xlu0 %370
        %v372 = vsel %vm296, %v362, 0.0
        %373 = vadd.xlane.f32.xlu0 %v372
        %v374 = vpop.xlane.xlu0 %373
        %v375 = vadd.f32 %v365, %v288
        %v376 = vadd.f32 %v368, %v289
        %v377 = vadd.f32 %v371, %v290
        %v378 = vadd.f32 %v374, %v291
        %v379 = vadd.f32 %v332, %v375
        %v380 = vadd.f32 %v333, %v376
        %v381 = vadd.f32 %v334, %v377
        %v382 = vadd.f32 %v335, %v378
        %v383 = vsub.f32 0.0, %v379
        %v384 = vsub.f32 0.0, %v380
        %v385 = vsub.f32 0.0, %v381
        %v386 = vsub.f32 0.0, %v382
        %v387 = vmul.f32 %v383, 1.442695
        %v388 = vpow.pop %v387
        %v389 = vmul.f32 %v384, 1.442695
        %v390 = vpow.pop %v389
        %v391 = vmul.f32 %v385, 1.442695
        %v392 = vpow.pop %v391
        %v393 = vmul.f32 %v386, 1.442695
        %v394 = vpow.pop %v393
        %v395 = vadd.f32 %v388, 1.0
        %v396 = vadd.f32 %v390, 1.0
        %v397 = vadd.f32 %v392, 1.0
        %v398 = vadd.f32 %v394, 1.0
        %v399 = vrcp.pop %v395
        %v400 = vmul.f32 1.0, %v399
        %v401 = vrcp.pop %v396
        %v402 = vmul.f32 1.0, %v401
        %v403 = vrcp.pop %v397
        %v404 = vmul.f32 1.0, %v403
        %v405 = vrcp.pop %v398
        %v406 = vmul.f32 1.0, %v405
        %408 = vset.pattern.permute.xlu0 0
        %409 = vperm.xlu0 %408, %v400
        %v410 = vpop.permute.xlu0 %409
        %413 = vset.pattern.permute.xlu0 0
        %414 = vperm.xlu0 %413, %v402
        %v415 = vpop.permute.xlu0 %414
        %418 = vset.pattern.permute.xlu0 0
        %419 = vperm.xlu0 %418, %v404
        %v420 = vpop.permute.xlu0 %419
        %423 = vset.pattern.permute.xlu0 0
        %424 = vperm.xlu0 %423, %v406
        %v425 = vpop.permute.xlu0 %424
        %v427 = vmul.f32 %v243, %v410
        %v428 = vmul.f32 %v244, %v410
        %v429 = vmul.f32 %v245, %v415
        %v430 = vmul.f32 %v246, %v415
        %v431 = vmul.f32 %v247, %v420
        %v432 = vmul.f32 %v248, %v420
        %v433 = vmul.f32 %v249, %v425
        %v434 = vmul.f32 %v250, %v425
        %435 = vst [vmem:[%s242] sm:$0xff] %v427
        %436 = vst [vmem:[%s242 + $0x8] sm:$0xff] %v428
        %437 = vst [vmem:[%s242 + $0x10] sm:$0xff] %v429
        %438 = vst [vmem:[%s242 + $0x18] sm:$0xff] %v430
        %439 = vst [vmem:[%s242 + $0x20] sm:$0xff] %v431
        %440 = vst [vmem:[%s242 + $0x28] sm:$0xff] %v432
        %441 = vst [vmem:[%s242 + $0x30] sm:$0xff] %v433
        %442 = vst [vmem:[%s242 + $0x38] sm:$0xff] %v434
        %s443 = sand.u32 %s140, 1
        %s444 = scalar_lea.sflag [#allocation4], %s443
        %s445 = sand.u32 %s140, 1
        %s446 = smul.addr %s445, 64
        %s447 = scalar_lea.vmem [#allocation5], %s446
        // Predicated region
        $region45: #{tpu_custom_call.1} parent=39 // pred_check
          %p448 = pneg %p150
        $region46: #{tpu_custom_call.1} parent=39 // pred_check_branch
          %450 = sbr.rel (%p448) target = $region48
        $region47: #{tpu_custom_call.1} parent=39 // pred_region
          %s452 = ssub.s32 1024, 1024
          %453 = vsyncadd %s444, %s452
          %s454 = smul.addr %s22, 8
          %s455 = smul.addr %s454, 128
          %s456 = scalar_lea.hbm %s5, %s455
          %s457 = sshll.u32 %s447, 4
          %s458 = int_to_ptr.vmem [resolvable:$true] %s457
          %463 = dma.vmem_to_hbm [thread:$0]  %s458, 1024, %s456, %s444, 256, 256, 16
        $region48: #{tpu_custom_call.1} parent=39 // pred_fallthru
          _
      $region40: #{tpu_custom_call.1} parent=5 // pred_fallthru
        _
      %p464 = scmp.le.s32.totalorder 2, %s17
      // Predicated region
      $region49: #{tpu_custom_call.1} parent=5 // pred_check
        %p465 = pneg %p464
      $region50: #{tpu_custom_call.1} parent=5 // pred_check_branch
        %467 = sbr.rel (%p465) target = $region52
      $region51: #{tpu_custom_call.1} parent=5 // pred_region
        %s468 = ssub.s32 %s17, 2
        // Predicated region
        $region53: #{tpu_custom_call.1} parent=51 // pred_check
          %p469 = pneg %p156
        $region54: #{tpu_custom_call.1} parent=51 // pred_check_branch
          %471 = sbr.rel (%p469) target = $region56
        $region55: #{tpu_custom_call.1} parent=51 // pred_region
          %s472 = sand.u32 %s141, 1
          %s473 = scalar_lea.sflag [#allocation4], %s472
          %s474 = sand.u32 %s141, 1
          %s475 = smul.addr %s474, 64
          %s476 = scalar_lea.vmem [#allocation5], %s475
          %477 = dma.done %s473, 1024
        $region56: #{tpu_custom_call.1} parent=51 // pred_fallthru
          _
      $region52: #{tpu_custom_call.1} parent=5 // pred_fallthru
        _
    $region6: #{tpu_custom_call.1} parent=1 // loop_footer
      %s21 = sadd.s32 1, %s17
    $region7: #{tpu_custom_call.1} parent=1 // loop_footer_branch
      %16 = sbr.rel target = $region3
    $region8: #{tpu_custom_call.1} parent=1 // loop_exit
      _
    %478 = vsyncpa [#allocation3], 1
    %s479 = scalar_lea.sflag [#allocation3], 1
    %480 = vsyncpa %s479, 1
    %481 = vsyncpa [#allocation4], 1
    %s482 = scalar_lea.sflag [#allocation4], 1
    %483 = vsyncpa %s482, 1

</llo_original>
